<compile_context>
chip_gen: v7x
topology: tpu7x:2x2x1
jax: 0.10.0
libtpu: 0.0.40
codegen_flags: <defaults>
</compile_context>

<pallas_src>
import functools

import jax
import jax.numpy as jnp
from jax.experimental import pallas as pl
from jax.experimental.pallas import tpu as pltpu


def _round_up(x, m):
    return ((x + m - 1) // m) * m


# ----------------------------------------------------------------------------
# Pallas kernel: streaming loss reduction (elementwise + accumulate)
# ----------------------------------------------------------------------------
def _criterion_kernel(phase, tile_n, n_rows, inv_denom, need_mask, *refs):
    # phase / shapes are static Python values -> branches resolve at trace time.
    if phase in (0, 1):
        g_ref, pv_ref, cw2_ref, cw3_ref, loss_ref, loss_occ_ref, acc_ref = refs
    else:
        g_ref, pv_ref, cw2_ref, loss_ref, loss_occ_ref, acc_ref = refs

    i = pl.program_id(0)

    @pl.when(i == 0)
    def _():
        acc_ref[0] = jnp.float32(0.0)   # running occupancy sum
        acc_ref[1] = jnp.float32(0.0)   # running weight-regularizer sum

    g = g_ref[...].astype(jnp.float32)      # pred_occ tile      [tile_n, P]
    pv = pv_ref[...].astype(jnp.float32)    # target_occ tile    [tile_n, P]
    cw2 = cw2_ref[...].astype(jnp.float32)  # binary_weights     [tile_n, C]

    if need_mask:
        rows = i * tile_n + jax.lax.broadcasted_iota(jnp.int32, (tile_n, 1), 0)
        rmask = (rows < n_rows).astype(jnp.float32)     # mask padded tail rows
        mask = lambda x: x * rmask
    else:
        mask = lambda x: x

    if phase in (0, 1):
        # loss_occ = mean((point_value - G)^2)
        occ_elem = (pv - g) ** 2
        # loss_weight = sum(|cw3-1|) + sum(clamp(cw2-1,min=0) - clamp(cw2,max=0))
        cw3 = cw3_ref[...].astype(jnp.float32)
        lw2 = jnp.maximum(cw2 - 1.0, 0.0) - jnp.minimum(cw2, 0.0)
        lw3 = jnp.abs(cw3 - 1.0)
        if cw2_ref.shape == cw3_ref.shape:
            w_sum = jnp.sum(mask(lw2 + lw3))            # fused single reduce
        else:
            w_sum = jnp.sum(mask(lw2)) + jnp.sum(mask(lw3))
    else:
        # loss_occ = mean((1-pv)*(1-clamp(G,max=1)) + pv*clamp(G,min=0))
        occ_elem = ((1.0 - pv) * (1.0 - jnp.minimum(g, 1.0))
                    + pv * jnp.maximum(g, 0.0))
        # loss_weight = sum((cw2<0.01)*|cw2|) + sum((cw2>=0.01)*|cw2-1|)
        w_sum = jnp.sum(mask(jnp.where(cw2 < 0.01,
                                       jnp.abs(cw2),
                                       jnp.abs(cw2 - 1.0))))

    acc_ref[0] += jnp.sum(mask(occ_elem))
    acc_ref[1] += w_sum

    @pl.when(i == pl.num_programs(0) - 1)
    def _():
        loss_occ = acc_ref[0] * inv_denom               # global-count mean
        loss_occ_ref[...] = jnp.full((1, 1), loss_occ, dtype=jnp.float32)
        loss_ref[...] = jnp.full((1, 1), loss_occ + acc_ref[1],
                                 dtype=jnp.float32)


def _pallas_loss(phase, g2d, pv2d, cw2_2d, cw3_2d):
    n_rows, p = g2d.shape

    # Row tile: big enough to hit HBM roofline (>=512 rows when available),
    # sublane-aligned, and bounded so 4 inputs x 2 pipeline buffers stay well
    # under the VMEM limit.
    tile_n = min(1024, _round_up(n_rows, 8))
    n_pad = _round_up(n_rows, tile_n)
    need_mask = n_pad != n_rows

    def pad_rows(x):
        if x.shape[0] == n_pad:
            return x
        return jnp.pad(x, ((0, n_pad - x.shape[0]), (0, 0)))

    inputs = [pad_rows(g2d), pad_rows(pv2d), pad_rows(cw2_2d)]
    if phase in (0, 1):
        inputs.append(pad_rows(cw3_2d))   # cw3 only streamed when actually used

    in_specs = [pl.BlockSpec((tile_n, x.shape[1]), lambda i: (i, 0))
                for x in inputs]
    grid = (n_pad // tile_n,)
    inv_denom = 1.0 / float(n_rows * p)

    kernel = functools.partial(_criterion_kernel, phase, tile_n, n_rows,
                               inv_denom, need_mask)

    bytes_accessed = int(sum(x.size * x.dtype.itemsize for x in inputs)) + 8
    flops = int(6 * sum(x.size for x in inputs))

    # TODO(synk): on v7x, split the row grid into ("parallel", "arbitrary")
    #             across the 2 TensorCores with per-core partial outputs and a
    #             2-element sum in the wrapper to double HBM ingest.
    loss, loss_occ = pl.pallas_call(
        kernel,
        out_shape=(jax.ShapeDtypeStruct((1, 1), jnp.float32),
                   jax.ShapeDtypeStruct((1, 1), jnp.float32)),
        grid=grid,
        in_specs=in_specs,
        out_specs=(pl.BlockSpec((1, 1), lambda i: (0, 0)),
                   pl.BlockSpec((1, 1), lambda i: (0, 0))),
        scratch_shapes=[pltpu.SMEM((2,), jnp.float32)],
        compiler_params=pltpu.CompilerParams(
            dimension_semantics=("arbitrary",),
            vmem_limit_bytes=32 * 1024 * 1024),
        cost_estimate=pl.CostEstimate(flops=flops, transcendentals=0,
                                      bytes_accessed=bytes_accessed),
    )(*inputs)
    return loss[0, 0], loss_occ[0, 0]


# ----------------------------------------------------------------------------
# SetCriterion wrapper (index glue in plain JAX)
# ----------------------------------------------------------------------------
class SetCriterion:
    def __init__(self, matcher, phase):
        self.matcher = matcher
        self.phase = phase

    def _get_src_permutation_idx(self, indices):
        batch_idx = jnp.concatenate(
            [jnp.full_like(src, i) for i, (src, _) in enumerate(indices)])
        src_idx = jnp.concatenate([src for src, _ in indices])
        return batch_idx, src_idx

    def __call__(self, outputs, targets):
        match_indices = self.matcher(outputs, targets)
        pred_occ = outputs['pred_occ']                       # [B, Q, P]
        B, Q, P = pred_occ.shape

        batch_idx, src_idx = self._get_src_permutation_idx(match_indices)
        target_occ_o = jnp.concatenate(
            [t[J] for t, (_, J) in zip(targets['occ'], match_indices)], axis=0)
        T = target_occ_o.shape[0]

        # target_occ[batch, src] = target_occ_o, zeros elsewhere.
        # Built via a length-(B*Q) int row-map scatter + row gather instead of
        # a full [B,Q,P] float zeros+scatter round trip.
        flat_pos = batch_idx * Q + src_idx
        row_map = jnp.full((B * Q,), T, dtype=jnp.int32).at[flat_pos].set(
            jnp.arange(T, dtype=jnp.int32))
        tgt_ext = jnp.concatenate(
            [target_occ_o.astype(jnp.float32), jnp.zeros((1, P), jnp.float32)],
            axis=0)
        pv2d = jnp.take(tgt_ext, row_map, axis=0)            # [B*Q, P]
        # TODO(synk): fuse this row gather into the kernel via scalar prefetch
        #             (manual DMA gather per row tile) to drop the remaining
        #             HBM pass; skipped since per-row pl.Element tiles would
        #             force 1-row grid steps (worse than one extra pass).

        cw2 = outputs['binary_weights']
        cw3 = outputs['merge_weights']
        g2d = pred_occ.reshape(-1, P)                        # native dtype
        cw2_2d = cw2.reshape(-1, cw2.shape[-1])
        cw3_2d = cw3.reshape(-1, cw3.shape[-1])

        loss_value, loss_occ = _pallas_loss(self.phase, g2d, pv2d,
                                            cw2_2d, cw3_2d)
        return {'loss_occ': loss_occ, 'loss': loss_value}


# Deterministic stand-in matcher (identity assignment per batch element).
# TODO(synk): the real Hungarian matcher is an injected dependency, not part of
#             this module's forward compute.
def identity_matcher(outputs, targets):
    return [(jnp.arange(t.shape[0], dtype=jnp.int32),
             jnp.arange(t.shape[0], dtype=jnp.int32))
            for t in targets['occ']]


# ----------------------------------------------------------------------------
# Pure-JAX reference for verification
# ----------------------------------------------------------------------------
def _ref_loss(phase, g, pv, cw2, cw3):
    if phase in (0, 1):
        loss_occ = jnp.mean((pv - g) ** 2)
        lw = jnp.sum(jnp.abs(cw3 - 1.0)) + \
             jnp.sum(jnp.maximum(cw2 - 1.0, 0.0) - jnp.minimum(cw2, 0.0))
    else:
        loss_occ = jnp.mean((1.0 - pv) * (1.0 - jnp.minimum(g, 1.0))
                            + pv * jnp.maximum(g, 0.0))
        small = (cw2 < 0.01).astype(jnp.float32)
        lw = jnp.sum(small * jnp.abs(cw2)) + \
             jnp.sum((1.0 - small) * jnp.abs(cw2 - 1.0))
    return loss_occ + lw, loss_occ


if __name__ == "__main__":
    key = jax.random.PRNGKey(0)
    B, Q, P, C = 2, 8, 128, 128

    k1, k2, k3, k4, k5 = jax.random.split(key, 5)
    pred_occ = jax.random.normal(k1, (B, Q, P), dtype=jnp.float32)
    binary_weights = jax.random.normal(k2, (B, Q, C), dtype=jnp.float32)
    merge_weights = jax.random.normal(k3, (B, Q, C), dtype=jnp.float32)

    # targets: per-batch list of occupancy tensors [n_tgt_i, P], values in {0,1}
    n_tgt = [5, 7]
    targets_occ = [
        (jax.random.uniform(k, (n, P)) > 0.5).astype(jnp.float32)
        for k, n in zip([k4, k5], n_tgt)
    ]

    outputs = {'pred_occ': pred_occ,
               'binary_weights': binary_weights,
               'merge_weights': merge_weights}
    targets = {'occ': targets_occ}

    for phase in (0, 2):
        criterion = SetCriterion(identity_matcher, phase=phase)
        loss_dict = criterion(outputs, targets)
        loss = jax.block_until_ready(loss_dict['loss'])
        loss_occ = jax.block_until_ready(loss_dict['loss_occ'])

        # Verify against pure-JAX reference.
        target_occ = jnp.zeros_like(pred_occ)
        for i, (t, n) in enumerate(zip(targets_occ, n_tgt)):
            target_occ = target_occ.at[i, :n].set(t)
        ref_loss, ref_loss_occ = _ref_loss(phase, pred_occ, target_occ,
                                           binary_weights, merge_weights)
        assert jnp.allclose(loss, ref_loss, rtol=1e-4, atol=1e-4), \
            f"phase {phase}: loss mismatch {loss} vs {ref_loss}"
        assert jnp.allclose(loss_occ, ref_loss_occ, rtol=1e-4, atol=1e-4), \
            f"phase {phase}: loss_occ mismatch {loss_occ} vs {ref_loss_occ}"

    print("KERNEL_OK")
</pallas_src>

<mosaic_0001>
module attributes {stable_mosaic.version = 11 : i64} {
  func.func @_criterion_kernel(%arg0: i32, %arg1: memref<16x128xf32, #tpu.memory_space<vmem>>, %arg2: memref<16x128xf32, #tpu.memory_space<vmem>>, %arg3: memref<16x128xf32, #tpu.memory_space<vmem>>, %arg4: memref<16x128xf32, #tpu.memory_space<vmem>>, %arg5: memref<1x1xf32, #tpu.memory_space<vmem>>, %arg6: memref<1x1xf32, #tpu.memory_space<vmem>>, %arg7: memref<2xf32, #tpu.memory_space<smem>>) attributes {dimension_semantics = [#tpu.dimension_semantics<arbitrary>], iteration_bounds = array<i64: 1>, scalar_prefetch = 0 : i64, scratch_operands = 1 : i64, tpu.core_type = #tpu.core_type<tc>, window_params = [{transform_indices = @transform_0, window_bounds = array<i64: 16, 128>}, {transform_indices = @transform_1, window_bounds = array<i64: 16, 128>}, {transform_indices = @transform_2, window_bounds = array<i64: 16, 128>}, {transform_indices = @transform_3, window_bounds = array<i64: 16, 128>}, {pipeline_mode = #tpu.pipeline_mode<synchronous>, transform_indices = @transform_4, window_bounds = array<i64: 1, 1>}, {pipeline_mode = #tpu.pipeline_mode<synchronous>, transform_indices = @transform_5, window_bounds = array<i64: 1, 1>}]} {
    %c0_i32 = arith.constant 0 : i32
    %0 = arith.cmpi eq, %arg0, %c0_i32 : i32
    %1 = arith.extui %0 : i1 to i32
    %c0_i32_0 = arith.constant 0 : i32
    %2 = arith.cmpi ne, %1, %c0_i32_0 : i32
    scf.if %2 {
      %cst_18 = arith.constant 0.000000e+00 : f32
      %c0_19 = arith.constant 0 : index
      %37 = memref.load %arg7[%c0_19] : memref<2xf32, #tpu.memory_space<smem>>
      memref.store %cst_18, %arg7[%c0_19] : memref<2xf32, #tpu.memory_space<smem>>
      %cst_20 = arith.constant 0.000000e+00 : f32
      %c1_21 = arith.constant 1 : index
      %38 = memref.load %arg7[%c1_21] : memref<2xf32, #tpu.memory_space<smem>>
      memref.store %cst_20, %arg7[%c1_21] : memref<2xf32, #tpu.memory_space<smem>>
    } else {
    }
    %c0 = arith.constant 0 : index
    %c0_1 = arith.constant 0 : index
    %3 = vector.load %arg1[%c0, %c0_1] : memref<16x128xf32, #tpu.memory_space<vmem>>, vector<16x128xf32>
    %c0_2 = arith.constant 0 : index
    %c0_3 = arith.constant 0 : index
    %4 = vector.load %arg2[%c0_2, %c0_3] : memref<16x128xf32, #tpu.memory_space<vmem>>, vector<16x128xf32>
    %c0_4 = arith.constant 0 : index
    %c0_5 = arith.constant 0 : index
    %5 = vector.load %arg3[%c0_4, %c0_5] : memref<16x128xf32, #tpu.memory_space<vmem>>, vector<16x128xf32>
    %6 = arith.subf %4, %3 : vector<16x128xf32>
    %7 = arith.mulf %6, %6 : vector<16x128xf32>
    %c0_6 = arith.constant 0 : index
    %c0_7 = arith.constant 0 : index
    %8 = vector.load %arg4[%c0_6, %c0_7] : memref<16x128xf32, #tpu.memory_space<vmem>>, vector<16x128xf32>
    %cst = arith.constant 1.000000e+00 : f32
    %9 = vector.broadcast %cst : f32 to vector<16x128xf32>
    %10 = arith.subf %5, %9 : vector<16x128xf32>
    %cst_8 = arith.constant 0.000000e+00 : f32
    %11 = vector.broadcast %cst_8 : f32 to vector<16x128xf32>
    %12 = arith.maximumf %10, %11 : vector<16x128xf32>
    %cst_9 = arith.constant 0.000000e+00 : f32
    %13 = vector.broadcast %cst_9 : f32 to vector<16x128xf32>
    %14 = arith.minimumf %5, %13 : vector<16x128xf32>
    %15 = arith.subf %12, %14 : vector<16x128xf32>
    %cst_10 = arith.constant 1.000000e+00 : f32
    %16 = vector.broadcast %cst_10 : f32 to vector<16x128xf32>
    %17 = arith.subf %8, %16 : vector<16x128xf32>
    %18 = math.absf %17 : vector<16x128xf32>
    %19 = arith.addf %15, %18 : vector<16x128xf32>
    %20 = vector.shape_cast %19 : vector<16x128xf32> to vector<1x16x128xf32>
    %cst_11 = arith.constant dense<0.000000e+00> : vector<1xf32>
    %21 = vector.multi_reduction <add>, %20, %cst_11 [1, 2] : vector<1x16x128xf32> to vector<1xf32>
    %22 = vector.shape_cast %21 : vector<1xf32> to vector<1x1x1xf32>
    %23 = vector.extract %22[0, 0, 0] : f32 from vector<1x1x1xf32>
    %c0_12 = arith.constant 0 : index
    %24 = memref.load %arg7[%c0_12] : memref<2xf32, #tpu.memory_space<smem>>
    %25 = vector.shape_cast %7 : vector<16x128xf32> to vector<1x16x128xf32>
    %cst_13 = arith.constant dense<0.000000e+00> : vector<1xf32>
    %26 = vector.multi_reduction <add>, %25, %cst_13 [1, 2] : vector<1x16x128xf32> to vector<1xf32>
    %27 = vector.shape_cast %26 : vector<1xf32> to vector<1x1x1xf32>
    %28 = vector.extract %27[0, 0, 0] : f32 from vector<1x1x1xf32>
    %29 = arith.addf %24, %28 : f32
    %c0_14 = arith.constant 0 : index
    %30 = memref.load %arg7[%c0_14] : memref<2xf32, #tpu.memory_space<smem>>
    memref.store %29, %arg7[%c0_14] : memref<2xf32, #tpu.memory_space<smem>>
    %c1 = arith.constant 1 : index
    %31 = memref.load %arg7[%c1] : memref<2xf32, #tpu.memory_space<smem>>
    %32 = arith.addf %31, %23 : f32
    %c1_15 = arith.constant 1 : index
    %33 = memref.load %arg7[%c1_15] : memref<2xf32, #tpu.memory_space<smem>>
    memref.store %32, %arg7[%c1_15] : memref<2xf32, #tpu.memory_space<smem>>
    %c0_i32_16 = arith.constant 0 : i32
    %34 = arith.cmpi eq, %arg0, %c0_i32_16 : i32
    %35 = arith.extui %34 : i1 to i32
    %c0_i32_17 = arith.constant 0 : i32
    %36 = arith.cmpi ne, %35, %c0_i32_17 : i32
    scf.if %36 {
      %c0_18 = arith.constant 0 : index
      %37 = memref.load %arg7[%c0_18] : memref<2xf32, #tpu.memory_space<smem>>
      %cst_19 = arith.constant 4.8828125E-4 : f32
      %38 = arith.mulf %37, %cst_19 : f32
      %39 = vector.broadcast %38 : f32 to vector<1x1xf32>
      %c0_20 = arith.constant 0 : index
      %c0_21 = arith.constant 0 : index
      %40 = vector.load %arg6[%c0_20, %c0_21] : memref<1x1xf32, #tpu.memory_space<vmem>>, vector<1x1xf32>
      tpu.vector_store %arg6[%c0_20, %c0_21], %39 {strides = array<i32>} : memref<1x1xf32, #tpu.memory_space<vmem>>, vector<1x1xf32>,
      %c1_22 = arith.constant 1 : index
      %41 = memref.load %arg7[%c1_22] : memref<2xf32, #tpu.memory_space<smem>>
      %42 = arith.addf %38, %41 : f32
      %43 = vector.broadcast %42 : f32 to vector<1x1xf32>
      %c0_23 = arith.constant 0 : index
      %c0_24 = arith.constant 0 : index
      %44 = vector.load %arg5[%c0_23, %c0_24] : memref<1x1xf32, #tpu.memory_space<vmem>>, vector<1x1xf32>
      tpu.vector_store %arg5[%c0_23, %c0_24], %43 {strides = array<i32>} : memref<1x1xf32, #tpu.memory_space<vmem>>, vector<1x1xf32>,
    } else {
    }
    return
  }
  func.func @transform_0(%arg0: i32) -> (i32, i32) {
    %c0_i32 = arith.constant 0 : i32
    %c0_i32_0 = arith.constant 0 : i32
    return %arg0, %c0_i32 : i32, i32
  }
  func.func @transform_1(%arg0: i32) -> (i32, i32) {
    %c0_i32 = arith.constant 0 : i32
    %c0_i32_0 = arith.constant 0 : i32
    return %arg0, %c0_i32 : i32, i32
  }
  func.func @transform_2(%arg0: i32) -> (i32, i32) {
    %c0_i32 = arith.constant 0 : i32
    %c0_i32_0 = arith.constant 0 : i32
    return %arg0, %c0_i32 : i32, i32
  }
  func.func @transform_3(%arg0: i32) -> (i32, i32) {
    %c0_i32 = arith.constant 0 : i32
    %c0_i32_0 = arith.constant 0 : i32
    return %arg0, %c0_i32 : i32, i32
  }
  func.func @transform_4(%arg0: i32) -> (i32, i32) {
    %c0_i32 = arith.constant 0 : i32
    %c0_i32_0 = arith.constant 0 : i32
    %c0_i32_1 = arith.constant 0 : i32
    return %c0_i32, %c0_i32_0 : i32, i32
  }
  func.func @transform_5(%arg0: i32) -> (i32, i32) {
    %c0_i32 = arith.constant 0 : i32
    %c0_i32_0 = arith.constant 0 : i32
    %c0_i32_1 = arith.constant 0 : i32
    return %c0_i32, %c0_i32_0 : i32, i32
  }
}

</mosaic_0001>

<llo_original>
// kernel: tpu_custom_call.1
$region0: #{tpu_custom_call.1}
  #allocation0 [shape = 'u32[]', space=smem, size = 0x4, offset = 0x4, fixed_abs, tag = 'smem constant byte address 0x4 - core index']
  #allocation1 [shape = 'u32[144,128]{1,0:T(1,128)}', space=vmem, size = 0x12000, scoped, tag = 'internal scratch']
  #allocation2 [shape = 'f32[2]{0:T(128)}', space=smem, size = 0x200, scoped, tag = 'scratch operand']
  %s0 = inlined_call_operand.hbm [shape: f32[16,128], index: 0, kind: input, shape index: {}]
  %s1 = inlined_call_operand.hbm [shape: f32[16,128], index: 1, kind: input, shape index: {}]
  %s2 = inlined_call_operand.hbm [shape: f32[16,128], index: 2, kind: input, shape index: {}]
  %s3 = inlined_call_operand.hbm [shape: f32[16,128], index: 3, kind: input, shape index: {}]
  %s4 = inlined_call_operand.hbm [shape: f32[1,1], index: 4, kind: output, shape index: {0}]
  %s5 = inlined_call_operand.hbm [shape: f32[1,1], index: 5, kind: output, shape index: {1}]
  %6 = xla_tuple %s4, %s5
  %s7 = sld [smem:[#allocation0]]
  $region58: #{tpu_custom_call.1} parent=0
    _
  %s9 = ssub.s32 1, %s7
  %s10 = scalar_select 0, %s9, %s7
  $region1: #{tpu_custom_call.1} parent=0
    #allocation3 [shape = 'u8[8192]{0}', space=vmem, size = 0x2000, scoped, tag = 'input window, operand 0, single buffered']
    #allocation4 [shape = 's32[1]{0}', space=sflag, size = 0x4, scoped, tag = 'scoped memory for tpu_custom_call.1']
    #allocation5 [shape = 's32[1]{0}', space=sflag, size = 0x4, scoped, tag = 'scoped memory for tpu_custom_call.1']
    #allocation6 [shape = 'u8[8192]{0}', space=vmem, size = 0x2000, scoped, tag = 'input window, operand 1, single buffered']
    #allocation7 [shape = 's32[1]{0}', space=sflag, size = 0x4, scoped, tag = 'scoped memory for tpu_custom_call.1']
    #allocation8 [shape = 'u8[8192]{0}', space=vmem, size = 0x2000, scoped, tag = 'input window, operand 2, single buffered']
    #allocation9 [shape = 'u8[8192]{0}', space=vmem, size = 0x2000, scoped, tag = 'input window, operand 3, single buffered']
    #allocation10 [shape = 's32[1]{0}', space=sflag, size = 0x4, scoped, tag = 'scoped memory for tpu_custom_call.1']
    #allocation11 [shape = 'u8[512]{0}', space=vmem, size = 0x400, scoped, tag = 'output window, operand 0, single buffered']
    #allocation12 [shape = 'u8[512]{0}', space=vmem, size = 0x400, scoped, tag = 'output window, operand 1, single buffered']
    #allocation13 [shape = 's32[1]{0}', space=sflag, size = 0x4, scoped, tag = 'scoped memory for tpu_custom_call.1']
    %11 = vsyncpa [#allocation4], 0
    %12 = vsyncpa [#allocation7], 0
    %13 = vsyncpa [#allocation10], 0
    %14 = vsyncpa [#allocation5], 0
    %15 = vsyncpa [#allocation13], 0
    // Predicated region
    $region2: #{tpu_custom_call.1} parent=1 // pred_check
      _
    $region3: #{tpu_custom_call.1} parent=1 // pred_check_branch
      %17 = sbr.rel (0) target = $region5
    $region4: #{tpu_custom_call.1} parent=1 // pred_region
      %s19 = ssub.s32 256, 256
      %20 = vsyncadd [#allocation4], %s19
      %s21 = sshll.u32 [#allocation3], 4
      %s22 = int_to_ptr.vmem [resolvable:$true] %s21
      %27 = dma.hbm_to_vmem [thread:$0]  %s0, 256, %s22, [#allocation4], 128, 128, 8
    $region5: #{tpu_custom_call.1} parent=1 // pred_fallthru
      _
    // Predicated region
    $region6: #{tpu_custom_call.1} parent=1 // pred_check
      _
    $region7: #{tpu_custom_call.1} parent=1 // pred_check_branch
      %29 = sbr.rel (0) target = $region9
    $region8: #{tpu_custom_call.1} parent=1 // pred_region
      %s31 = ssub.s32 256, 256
      %32 = vsyncadd [#allocation7], %s31
      %s33 = sshll.u32 [#allocation6], 4
      %s34 = int_to_ptr.vmem [resolvable:$true] %s33
      %39 = dma.hbm_to_vmem [thread:$0]  %s1, 256, %s34, [#allocation7], 128, 128, 8
    $region9: #{tpu_custom_call.1} parent=1 // pred_fallthru
      _
    // Predicated region
    $region10: #{tpu_custom_call.1} parent=1 // pred_check
      _
    $region11: #{tpu_custom_call.1} parent=1 // pred_check_branch
      %41 = sbr.rel (0) target = $region13
    $region12: #{tpu_custom_call.1} parent=1 // pred_region
      %s43 = ssub.s32 256, 256
      %44 = vsyncadd [#allocation7], %s43
      %s45 = sshll.u32 [#allocation8], 4
      %s46 = int_to_ptr.vmem [resolvable:$true] %s45
      %51 = dma.hbm_to_vmem [thread:$0]  %s2, 256, %s46, [#allocation7], 128, 128, 8
    $region13: #{tpu_custom_call.1} parent=1 // pred_fallthru
      _
    // Predicated region
    $region14: #{tpu_custom_call.1} parent=1 // pred_check
      _
    $region15: #{tpu_custom_call.1} parent=1 // pred_check_branch
      %53 = sbr.rel (0) target = $region17
    $region16: #{tpu_custom_call.1} parent=1 // pred_region
      %s55 = ssub.s32 256, 256
      %56 = vsyncadd [#allocation10], %s55
      %s57 = sshll.u32 [#allocation9], 4
      %s58 = int_to_ptr.vmem [resolvable:$true] %s57
      %63 = dma.hbm_to_vmem [thread:$0]  %s3, 256, %s58, [#allocation10], 128, 128, 8
    $region17: #{tpu_custom_call.1} parent=1 // pred_fallthru
      _
    // Predicated region
    $region18: #{tpu_custom_call.1} parent=1 // pred_check
      _
    $region19: #{tpu_custom_call.1} parent=1 // pred_check_branch
      %65 = sbr.rel (0) target = $region21
    $region20: #{tpu_custom_call.1} parent=1 // pred_region
      %66 = dma.done [#allocation4], 256
    $region21: #{tpu_custom_call.1} parent=1 // pred_fallthru
      _
    // Predicated region
    $region22: #{tpu_custom_call.1} parent=1 // pred_check
      _
    $region23: #{tpu_custom_call.1} parent=1 // pred_check_branch
      %68 = sbr.rel (0) target = $region25
    $region24: #{tpu_custom_call.1} parent=1 // pred_region
      %69 = dma.done [#allocation7], 256
    $region25: #{tpu_custom_call.1} parent=1 // pred_fallthru
      _
    // Predicated region
    $region26: #{tpu_custom_call.1} parent=1 // pred_check
      _
    $region27: #{tpu_custom_call.1} parent=1 // pred_check_branch
      %71 = sbr.rel (0) target = $region29
    $region28: #{tpu_custom_call.1} parent=1 // pred_region
      %72 = dma.done [#allocation7], 256
    $region29: #{tpu_custom_call.1} parent=1 // pred_fallthru
      _
    // Predicated region
    $region30: #{tpu_custom_call.1} parent=1 // pred_check
      _
    $region31: #{tpu_custom_call.1} parent=1 // pred_check_branch
      %74 = sbr.rel (0) target = $region33
    $region32: #{tpu_custom_call.1} parent=1 // pred_region
      %75 = dma.done [#allocation10], 256
    $region33: #{tpu_custom_call.1} parent=1 // pred_fallthru
      _
    %p76 = scmp.eq.s32.totalorder 0, 0
    // Predicated region
    $region34: #{tpu_custom_call.1} parent=1 // pred_check
      %p77 = pneg %p76
    $region35: #{tpu_custom_call.1} parent=1 // pred_check_branch
      %79 = sbr.rel (%p77) target = $region37
    $region36: #{tpu_custom_call.1} parent=1 // pred_region
      %s80 = scalar_lea.smem [#allocation2], 0
      %81 = sst [smem:[%s80]] 0.0
      %s82 = scalar_lea.smem [#allocation2], 1
      %83 = sst [smem:[%s82]] 0.0
    $region37: #{tpu_custom_call.1} parent=1 // pred_fallthru
      _
    %v84 = vld [vmem:[#allocation3] sm:$0xff]
    %v85 = vld [vmem:[#allocation3 + $0x8] sm:$0xff]
    %v86 = vld [vmem:[#allocation6] sm:$0xff]
    %v87 = vld [vmem:[#allocation6 + $0x8] sm:$0xff]
    %v88 = vld [vmem:[#allocation8] sm:$0xff]
    %v89 = vld [vmem:[#allocation8 + $0x8] sm:$0xff]
    %v90 = vsub.f32 %v86, %v84
    %v91 = vsub.f32 %v87, %v85
    %v92 = vmul.f32 %v90, %v90
    %v93 = vmul.f32 %v91, %v91
    %v94 = vld [vmem:[#allocation9] sm:$0xff]
    %v95 = vld [vmem:[#allocation9 + $0x8] sm:$0xff]
    %v96 = vsub.f32 %v88, 1.0
    %v97 = vsub.f32 %v89, 1.0
    %v98 = vmax.f32 %v96, 0.0
    %v99 = vmax.f32 %v97, 0.0
    %v100 = vmin.f32 %v88, 0.0
    %v101 = vmin.f32 %v89, 0.0
    %v102 = vsub.f32 %v98, %v100
    %v103 = vsub.f32 %v99, %v101
    %v104 = vsub.f32 %v94, 1.0
    %v105 = vsub.f32 %v95, 1.0
    %v106 = vand.u32 2147483647, %v104
    %v107 = vand.u32 2147483647, %v105
    %v108 = vadd.f32 %v102, %v106
    %v109 = vadd.f32 %v103, %v107
    %v110 = vadd.f32 %v108, %v109
    %111 = vadd.xlane.f32.xlu0 %v110
    %v112 = vpop.xlane.xlu0 %111
    %v113 = vrot.slane %v112, 4
    %v114 = vadd.f32 %v112, %v113
    %v115 = vrot.slane %v114, 2
    %v116 = vadd.f32 %v114, %v115
    %v117 = vrot.slane %v116, 1
    %v118 = vadd.f32 %v116, %v117
    %s119 = vtos %v118
    %s120 = sld [smem:[#allocation2]]
    %v121 = vadd.f32 %v92, %v93
    %122 = vadd.xlane.f32.xlu0 %v121
    %v123 = vpop.xlane.xlu0 %122
    %v124 = vrot.slane %v123, 4
    %v125 = vadd.f32 %v123, %v124
    %v126 = vrot.slane %v125, 2
    %v127 = vadd.f32 %v125, %v126
    %v128 = vrot.slane %v127, 1
    %v129 = vadd.f32 %v127, %v128
    %s130 = vtos %v129
    %s131 = sadd.f32 %s120, %s130
    %s132 = scalar_lea.smem [#allocation2], 0
    %133 = sst [smem:[%s132]] %s131
    %s134 = sld [smem:[#allocation2 + $0x1]]
    %s135 = sadd.f32 %s134, %s119
    %s136 = scalar_lea.smem [#allocation2], 1
    %137 = sst [smem:[%s136]] %s135
    // Predicated region
    $region38: #{tpu_custom_call.1} parent=1 // pred_check
      %p138 = pneg %p76
    $region39: #{tpu_custom_call.1} parent=1 // pred_check_branch
      %140 = sbr.rel (%p138) target = $region41
    $region40: #{tpu_custom_call.1} parent=1 // pred_region
      %s141 = sld [smem:[#allocation2]]
      %s142 = smul.f32 %s141, 0.00048828125
      %v143 = vstv %s142
      %vm144 = vcmask 0
      %145 = vst.msk [vmem:[#allocation12] sm:$0x1] %vm144, %v143
      %s146 = sld [smem:[#allocation2 + $0x1]]
      %s147 = sadd.f32 %s142, %s146
      %v148 = vstv %s147
      %149 = vst.msk [vmem:[#allocation11] sm:$0x1] %vm144, %v148
    $region41: #{tpu_custom_call.1} parent=1 // pred_fallthru
      _
    // Predicated region
    $region42: #{tpu_custom_call.1} parent=1 // pred_check
      _
    $region43: #{tpu_custom_call.1} parent=1 // pred_check_branch
      %151 = sbr.rel (0) target = $region45
    $region44: #{tpu_custom_call.1} parent=1 // pred_region
      %s153 = ssub.s32 16, 16
      %154 = vsyncadd [#allocation5], %s153
      %s156 = sshll.u32 [#allocation11], 4
      %s157 = int_to_ptr.vmem [resolvable:$true] %s156
      %159 = dma.vmem_to_hbm [thread:$0]  %s157, 16, %s4, [#allocation5]
    $region45: #{tpu_custom_call.1} parent=1 // pred_fallthru
      _
    // Predicated region
    $region46: #{tpu_custom_call.1} parent=1 // pred_check
      _
    $region47: #{tpu_custom_call.1} parent=1 // pred_check_branch
      %161 = sbr.rel (0) target = $region49
    $region48: #{tpu_custom_call.1} parent=1 // pred_region
      %s163 = ssub.s32 16, 16
      %164 = vsyncadd [#allocation13], %s163
      %s166 = sshll.u32 [#allocation12], 4
      %s167 = int_to_ptr.vmem [resolvable:$true] %s166
      %169 = dma.vmem_to_hbm [thread:$0]  %s167, 16, %s5, [#allocation13]
    $region49: #{tpu_custom_call.1} parent=1 // pred_fallthru
      _
    // Predicated region
    $region50: #{tpu_custom_call.1} parent=1 // pred_check
      _
    $region51: #{tpu_custom_call.1} parent=1 // pred_check_branch
      %171 = sbr.rel (0) target = $region53
    $region52: #{tpu_custom_call.1} parent=1 // pred_region
      %172 = dma.done [#allocation5], 16
    $region53: #{tpu_custom_call.1} parent=1 // pred_fallthru
      _
    // Predicated region
    $region54: #{tpu_custom_call.1} parent=1 // pred_check
      _
    $region55: #{tpu_custom_call.1} parent=1 // pred_check_branch
      %174 = sbr.rel (0) target = $region57
    $region56: #{tpu_custom_call.1} parent=1 // pred_region
      %175 = dma.done [#allocation13], 16
    $region57: #{tpu_custom_call.1} parent=1 // pred_fallthru
      _
    %176 = vsyncpa [#allocation4], 1
    %177 = vsyncpa [#allocation7], 1
    %178 = vsyncpa [#allocation10], 1
    %179 = vsyncpa [#allocation5], 1
    %180 = vsyncpa [#allocation13], 1

</llo_original>
